<compile_context>
chip_gen: v5e
topology: v5e:2x2
jax: 0.10.0
libtpu: 0.0.40
codegen_flags: <defaults>
</compile_context>

<pallas_src>
import jax
import jax.numpy as jnp
import numpy as np
from jax.experimental import pallas as pl
from jax.experimental.pallas import tpu as pltpu

LN_EPS = 1e-5  # PyTorch nn.LayerNorm default


def _round_up(x, m):
    return ((x + m - 1) // m) * m


# -----------------------------------------------------------------------------
# Kernel
# -----------------------------------------------------------------------------
def _make_actor_kernel(fc1_true, fc2_true, fc1_pad, fc2_pad, na_pad):
    """Build the kernel closed over static (true / padded) feature widths."""
    inv_n1 = np.float32(1.0 / fc1_true)
    inv_n2 = np.float32(1.0 / fc2_true)

    def _ln_relu(h, gamma, beta, n_true, n_pad, inv_n):
        # h: (bm, n_pad) f32 with padded columns exactly zero, so full-lane
        # sums are already sums over the TRUE columns.
        mean = jnp.sum(h, axis=-1, keepdims=True) * inv_n
        d = h - mean
        if n_pad != n_true:
            # Two-pass variance needs the padded lanes (-mean) zeroed out.
            col = jax.lax.broadcasted_iota(jnp.int32, (1, n_pad), 1)
            d = jnp.where(col < n_true, d, 0.0)
        var = jnp.sum(d * d, axis=-1, keepdims=True) * inv_n
        # gamma/beta are zero in padded columns -> padded cols stay 0.
        out = d * jax.lax.rsqrt(var + LN_EPS) * gamma + beta
        return jnp.maximum(out, 0.0)

    def kernel(x_ref, w1_ref, w2_ref, w3_ref, vec_ref, o_ref):
        # fc1 -> LayerNorm -> ReLU. x already bf16 (cast in wrapper); K = true
        # input width (no K padding). bf16 MXU operands, f32 accumulate.
        h = jnp.dot(x_ref[...], w1_ref[...], preferred_element_type=jnp.float32)
        h = h + vec_ref[0:1, 0:fc1_pad]                                   # b1
        h = _ln_relu(h, vec_ref[1:2, 0:fc1_pad], vec_ref[2:3, 0:fc1_pad],
                     fc1_true, fc1_pad, inv_n1)

        # fc2 -> LayerNorm -> ReLU
        h = jnp.dot(h.astype(jnp.bfloat16), w2_ref[...],
                    preferred_element_type=jnp.float32)
        h = h + vec_ref[3:4, 0:fc2_pad]                                   # b2
        h = _ln_relu(h, vec_ref[4:5, 0:fc2_pad], vec_ref[5:6, 0:fc2_pad],
                     fc2_true, fc2_pad, inv_n2)

        # mu -> tanh
        h = jnp.dot(h.astype(jnp.bfloat16), w3_ref[...],
                    preferred_element_type=jnp.float32)
        h = h + vec_ref[6:7, 0:na_pad]                                    # b3
        o_ref[...] = jnp.tanh(h)

    return kernel


# -----------------------------------------------------------------------------
# Parameter init (reproduces PyTorch __init__ semantics) and packing
# -----------------------------------------------------------------------------
def init_actor_params(key, input_dim, fc1_dims, fc2_dims, n_actions):
    """f32 params. Weights stored as [in, out] (transpose of PyTorch layout).

    Note: the original code uses f = 1/sqrt(weight.size()[0]) which is the
    OUT-feature count (PyTorch weight is [out, in]); reproduced exactly.
    """
    ks = jax.random.split(key, 6)
    f1 = 1.0 / np.sqrt(fc1_dims)
    f2 = 1.0 / np.sqrt(fc2_dims)
    f3 = 0.003

    def unif(k, shape, bound):
        return jax.random.uniform(k, shape, jnp.float32, -bound, bound)

    return {
        "w1": unif(ks[0], (input_dim, fc1_dims), f1),
        "b1": unif(ks[1], (fc1_dims,), f1),
        "g1": jnp.ones((fc1_dims,), jnp.float32),
        "be1": jnp.zeros((fc1_dims,), jnp.float32),
        "w2": unif(ks[2], (fc1_dims, fc2_dims), f2),
        "b2": unif(ks[3], (fc2_dims,), f2),
        "g2": jnp.ones((fc2_dims,), jnp.float32),
        "be2": jnp.zeros((fc2_dims,), jnp.float32),
        "w3": unif(ks[4], (fc2_dims, n_actions), f3),
        "b3": unif(ks[5], (n_actions,), f3),
    }


def pack_actor_params(p, input_dim, fc1_dims, fc2_dims, n_actions):
    """One-time packing: weights -> bf16 slabs (output dims padded to 128,
    input dim of fc1 kept at its TRUE width), vectors -> one (8, V) slab."""
    fc1_pad = _round_up(fc1_dims, 128)
    fc2_pad = _round_up(fc2_dims, 128)
    na_pad = _round_up(n_actions, 128)
    v_pad = max(fc1_pad, fc2_pad, na_pad)

    def pad2(w, r, c):
        return jnp.pad(w, ((0, r - w.shape[0]), (0, c - w.shape[1])))

    packed = {
        "w1": pad2(p["w1"], input_dim, fc1_pad).astype(jnp.bfloat16),  # no K pad
        "w2": pad2(p["w2"], fc1_pad, fc2_pad).astype(jnp.bfloat16),
        "w3": pad2(p["w3"], fc2_pad, na_pad).astype(jnp.bfloat16),
    }
    vecs = jnp.zeros((8, v_pad), jnp.float32)
    vecs = vecs.at[0, :fc1_dims].set(p["b1"])
    vecs = vecs.at[1, :fc1_dims].set(p["g1"])
    vecs = vecs.at[2, :fc1_dims].set(p["be1"])
    vecs = vecs.at[3, :fc2_dims].set(p["b2"])
    vecs = vecs.at[4, :fc2_dims].set(p["g2"])
    vecs = vecs.at[5, :fc2_dims].set(p["be2"])
    vecs = vecs.at[6, :n_actions].set(p["b3"])
    packed["vecs"] = vecs

    dims = dict(input_dim=input_dim, fc1=fc1_dims, fc2=fc2_dims, na=n_actions,
                fc1_pad=fc1_pad, fc2_pad=fc2_pad, na_pad=na_pad, v_pad=v_pad)
    return packed, dims


# -----------------------------------------------------------------------------
# Block-size heuristic
# -----------------------------------------------------------------------------
def _choose_block_m(B, max_block_m=512):
    """Batch tile:
    * tiny B (<=128): one 16-row-aligned tile (bf16 sublane packing; the call
      is latency/overhead bound anyway).
    * large B: a multiple of 128 (full MXU row groups), default 512 rows
      (v5e/v6e HBM roofline), capped at ceil(B/2) rounded to 128 so the
      "parallel" batch grid has >=2 steps and both v7x TensorCores get work.
    """
    if B <= 128:
        return _round_up(B, 16)
    half = _round_up((B + 1) // 2, 128)
    return max(128, min(_round_up(max_block_m, 128), half))


# -----------------------------------------------------------------------------
# Forward wrapper
# -----------------------------------------------------------------------------
def _call_pallas(x, packed, dims, bm, vmem_limit, cost, single_buffer_weights):
    d_in = dims["input_dim"]
    fc1_pad, fc2_pad = dims["fc1_pad"], dims["fc2_pad"]
    na_pad, v_pad = dims["na_pad"], dims["v_pad"]
    b_pad = x.shape[0]
    grid = (b_pad // bm,)

    kernel = _make_actor_kernel(dims["fc1"], dims["fc2"], fc1_pad, fc2_pad, na_pad)

    def invariant(shape):
        # Grid-invariant blocks: fetched once; single buffer saves VMEM.
        if single_buffer_weights:
            return pl.BlockSpec(shape, lambda i: (0, 0),
                                pipeline_mode=pl.Buffered(1))
        return pl.BlockSpec(shape, lambda i: (0, 0))

    return pl.pallas_call(
        kernel,
        out_shape=jax.ShapeDtypeStruct((b_pad, na_pad), jnp.float32),
        grid=grid,
        in_specs=[
            pl.BlockSpec((bm, d_in), lambda i: (i, 0)),   # state tile (bf16, true width)
            invariant((d_in, fc1_pad)),                   # w1
            invariant((fc1_pad, fc2_pad)),                # w2
            invariant((fc2_pad, na_pad)),                 # w3
            invariant((8, v_pad)),                        # packed b/gamma/beta
        ],
        out_specs=pl.BlockSpec((bm, na_pad), lambda i: (i, 0)),
        compiler_params=pltpu.CompilerParams(
            dimension_semantics=("parallel",),
            vmem_limit_bytes=vmem_limit),
        cost_estimate=cost,
    )(x, packed["w1"], packed["w2"], packed["w3"], packed["vecs"])


def actor_forward(state, packed, dims, *, block_m=None):
    """state: [B, input_dim] float32 or bfloat16 -> [B, n_actions] float32.

    Pass a bf16 state whose batch is already a multiple of the block size to
    skip the wrapper-side cast/pad passes entirely.
    """
    B, d_in = state.shape
    assert d_in == dims["input_dim"]
    fc1_pad, fc2_pad = dims["fc1_pad"], dims["fc2_pad"]
    na_pad = dims["na_pad"]

    bm = _choose_block_m(B, max_block_m=block_m or 512)
    b_pad = _round_up(B, bm)

    # bf16 cast + (only if needed) batch pad — no feature-dim padding.
    x = state if state.dtype == jnp.bfloat16 else state.astype(jnp.bfloat16)
    if b_pad != B:
        x = jnp.pad(x, ((0, b_pad - B), (0, 0)))

    w_bytes = sum(int(packed[k].size) * packed[k].dtype.itemsize
                  for k in ("w1", "w2", "w3", "vecs"))

    # Advisory cost hint for the XLA scheduler.
    flops = 2 * b_pad * (d_in * fc1_pad + fc1_pad * fc2_pad + fc2_pad * na_pad)
    transcendentals = b_pad * (2 + na_pad)      # 2 rsqrt per row + tanh per output
    bytes_accessed = b_pad * d_in * 2 + w_bytes + b_pad * na_pad * 4
    cost = pl.CostEstimate(flops=int(flops), transcendentals=int(transcendentals),
                           bytes_accessed=int(bytes_accessed))

    # VMEM budget from the actual block sizes (double-buffered x/out, weights,
    # f32 intermediates + headroom); never below the common 32 MiB default,
    # capped at v7x's 64 MiB physical VMEM per TensorCore.
    max_pad = max(fc1_pad, fc2_pad, na_pad)
    vmem_est = (2 * (bm * d_in * 2 + bm * na_pad * 4)
                + 2 * w_bytes
                + 8 * bm * max_pad * 4)
    vmem_limit = int(min(64 << 20, max(32 << 20, vmem_est)))

    try:
        out = _call_pallas(x, packed, dims, bm, vmem_limit, cost,
                           single_buffer_weights=True)
    except Exception:
        # Fallback if this JAX/libtpu version rejects pl.Buffered(1) on
        # pallas_call inputs: default double buffering (weights are tiny).
        out = _call_pallas(x, packed, dims, bm, vmem_limit, cost,
                           single_buffer_weights=False)

    return out[:B, :dims["na"]]


# -----------------------------------------------------------------------------
# Pure-JAX reference (same bf16-matmul / f32-accumulate precision)
# -----------------------------------------------------------------------------
def actor_forward_ref(state, p):
    def mm(a, w):
        return jnp.dot(a.astype(jnp.bfloat16), w.astype(jnp.bfloat16),
                       preferred_element_type=jnp.float32)

    def ln(h, g, b):
        mean = jnp.mean(h, axis=-1, keepdims=True)
        var = jnp.mean((h - mean) ** 2, axis=-1, keepdims=True)
        return (h - mean) * jax.lax.rsqrt(var + LN_EPS) * g[None, :] + b[None, :]

    h = mm(state, p["w1"]) + p["b1"][None, :]
    h = jnp.maximum(ln(h, p["g1"], p["be1"]), 0.0)
    h = mm(h, p["w2"]) + p["b2"][None, :]
    h = jnp.maximum(ln(h, p["g2"], p["be2"]), 0.0)
    return jnp.tanh(mm(h, p["w3"]) + p["b3"][None, :])


if __name__ == "__main__":
    key = jax.random.PRNGKey(0)
    k_param, k_state = jax.random.split(key)

    batch = 4
    input_dim = 16     # input_dims = (16,)
    fc1_dims = 64
    fc2_dims = 32
    n_actions = 8

    params = init_actor_params(k_param, input_dim, fc1_dims, fc2_dims, n_actions)
    packed, dims = pack_actor_params(params, input_dim, fc1_dims, fc2_dims, n_actions)
    state = jax.random.normal(k_state, (batch, input_dim), jnp.float32)

    out = actor_forward(state, packed, dims)
    out = jax.block_until_ready(out)

    ref = actor_forward_ref(state, params)
    np.testing.assert_allclose(np.asarray(out), np.asarray(ref),
                               rtol=1e-3, atol=1e-3)

    print("KERNEL_OK")
</pallas_src>

<mosaic_0001>
module attributes {stable_mosaic.version = 11 : i64} {
  func.func @kernel(%arg0: i32, %arg1: memref<16x16xbf16, #tpu.memory_space<vmem>>, %arg2: memref<16x128xbf16, #tpu.memory_space<vmem>>, %arg3: memref<128x128xbf16, #tpu.memory_space<vmem>>, %arg4: memref<128x128xbf16, #tpu.memory_space<vmem>>, %arg5: memref<8x128xf32, #tpu.memory_space<vmem>>, %arg6: memref<16x128xf32, #tpu.memory_space<vmem>>) attributes {dimension_semantics = [#tpu.dimension_semantics<parallel>], iteration_bounds = array<i64: 1>, scalar_prefetch = 0 : i64, scratch_operands = 0 : i64, tpu.core_type = #tpu.core_type<tc>, window_params = [{transform_indices = @transform_0, window_bounds = array<i64: 16, 16>}, {pipeline_mode = #tpu.pipeline_mode<synchronous>, transform_indices = @transform_1, window_bounds = array<i64: 16, 128>}, {pipeline_mode = #tpu.pipeline_mode<synchronous>, transform_indices = @transform_2, window_bounds = array<i64: 128, 128>}, {pipeline_mode = #tpu.pipeline_mode<synchronous>, transform_indices = @transform_3, window_bounds = array<i64: 128, 128>}, {pipeline_mode = #tpu.pipeline_mode<synchronous>, transform_indices = @transform_4, window_bounds = array<i64: 8, 128>}, {transform_indices = @transform_5, window_bounds = array<i64: 16, 128>}]} {
    %c0 = arith.constant 0 : index
    %c0_0 = arith.constant 0 : index
    %0 = vector.load %arg1[%c0, %c0_0] : memref<16x16xbf16, #tpu.memory_space<vmem>>, vector<16x16xbf16>
    %c0_1 = arith.constant 0 : index
    %c0_2 = arith.constant 0 : index
    %1 = vector.load %arg2[%c0_1, %c0_2] : memref<16x128xbf16, #tpu.memory_space<vmem>>, vector<16x128xbf16>
    %cst = arith.constant dense<0.000000e+00> : vector<16x128xf32>
    %2 = tpu.matmul %0, %1, %cst {dimension_numbers = #tpu.dot_dimension_numbers<[1], [0], [0], [1], [0, 0, 1, 1], [], []>} : vector<16x16xbf16>, vector<16x128xbf16>, vector<16x128xf32> -> vector<16x128xf32>
    %c0_3 = arith.constant 0 : index
    %c0_4 = arith.constant 0 : index
    %3 = vector.load %arg5[%c0_3, %c0_4] : memref<8x128xf32, #tpu.memory_space<vmem>>, vector<1x128xf32>
    %4 = vector.broadcast %3 : vector<1x128xf32> to vector<16x128xf32>
    %5 = arith.addf %2, %4 : vector<16x128xf32>
    %c1 = arith.constant 1 : index
    %c0_5 = arith.constant 0 : index
    %6 = vector.load %arg5[%c1, %c0_5] : memref<8x128xf32, #tpu.memory_space<vmem>>, vector<1x128xf32>
    %c2 = arith.constant 2 : index
    %c0_6 = arith.constant 0 : index
    %7 = vector.load %arg5[%c2, %c0_6] : memref<8x128xf32, #tpu.memory_space<vmem>>, vector<1x128xf32>
    %cst_7 = arith.constant dense<0.000000e+00> : vector<16xf32>
    %8 = vector.multi_reduction <add>, %5, %cst_7 [1] : vector<16x128xf32> to vector<16xf32>
    %9 = vector.shape_cast %8 : vector<16xf32> to vector<16x1xf32>
    %cst_8 = arith.constant 1.562500e-02 : f32
    %10 = vector.broadcast %cst_8 : f32 to vector<16x1xf32>
    %11 = arith.mulf %9, %10 : vector<16x1xf32>
    %12 = vector.broadcast %11 : vector<16x1xf32> to vector<16x128xf32>
    %13 = arith.subf %5, %12 : vector<16x128xf32>
    %14 = tpu.iota {dimensions = array<i32: 1>} : vector<1x128xi32>
    %c64_i32 = arith.constant 64 : i32
    %15 = vector.broadcast %c64_i32 : i32 to vector<1x128xi32>
    %16 = arith.cmpi slt, %14, %15 : vector<1x128xi32>
    %cst_9 = arith.constant 0.000000e+00 : f32
    %17 = vector.shape_cast %16 : vector<1x128xi1> to vector<1x128xi1>
    %18 = vector.broadcast %17 : vector<1x128xi1> to vector<16x128xi1>
    %19 = vector.broadcast %cst_9 : f32 to vector<16x128xf32>
    %20 = arith.select %18, %13, %19 : vector<16x128xi1>, vector<16x128xf32>
    %21 = arith.mulf %20, %20 : vector<16x128xf32>
    %cst_10 = arith.constant dense<0.000000e+00> : vector<16xf32>
    %22 = vector.multi_reduction <add>, %21, %cst_10 [1] : vector<16x128xf32> to vector<16xf32>
    %23 = vector.shape_cast %22 : vector<16xf32> to vector<16x1xf32>
    %cst_11 = arith.constant 1.562500e-02 : f32
    %24 = vector.broadcast %cst_11 : f32 to vector<16x1xf32>
    %25 = arith.mulf %23, %24 : vector<16x1xf32>
    %cst_12 = arith.constant 9.99999974E-6 : f32
    %26 = vector.broadcast %cst_12 : f32 to vector<16x1xf32>
    %27 = arith.addf %25, %26 : vector<16x1xf32>
    %28 = math.rsqrt %27 : vector<16x1xf32>
    %29 = vector.broadcast %28 : vector<16x1xf32> to vector<16x128xf32>
    %30 = arith.mulf %20, %29 : vector<16x128xf32>
    %31 = vector.broadcast %6 : vector<1x128xf32> to vector<16x128xf32>
    %32 = arith.mulf %30, %31 : vector<16x128xf32>
    %33 = vector.broadcast %7 : vector<1x128xf32> to vector<16x128xf32>
    %34 = arith.addf %32, %33 : vector<16x128xf32>
    %cst_13 = arith.constant 0.000000e+00 : f32
    %35 = vector.broadcast %cst_13 : f32 to vector<16x128xf32>
    %36 = arith.maximumf %34, %35 : vector<16x128xf32>
    %37 = arith.truncf %36 : vector<16x128xf32> to vector<16x128xbf16>
    %c0_14 = arith.constant 0 : index
    %c0_15 = arith.constant 0 : index
    %38 = vector.load %arg3[%c0_14, %c0_15] : memref<128x128xbf16, #tpu.memory_space<vmem>>, vector<128x128xbf16>
    %cst_16 = arith.constant dense<0.000000e+00> : vector<16x128xf32>
    %39 = tpu.matmul %37, %38, %cst_16 {dimension_numbers = #tpu.dot_dimension_numbers<[1], [0], [0], [1], [0, 0, 1, 1], [], []>} : vector<16x128xbf16>, vector<128x128xbf16>, vector<16x128xf32> -> vector<16x128xf32>
    %c3 = arith.constant 3 : index
    %c0_17 = arith.constant 0 : index
    %40 = vector.load %arg5[%c3, %c0_17] : memref<8x128xf32, #tpu.memory_space<vmem>>, vector<1x128xf32>
    %41 = vector.broadcast %40 : vector<1x128xf32> to vector<16x128xf32>
    %42 = arith.addf %39, %41 : vector<16x128xf32>
    %c4 = arith.constant 4 : index
    %c0_18 = arith.constant 0 : index
    %43 = vector.load %arg5[%c4, %c0_18] : memref<8x128xf32, #tpu.memory_space<vmem>>, vector<1x128xf32>
    %c5 = arith.constant 5 : index
    %c0_19 = arith.constant 0 : index
    %44 = vector.load %arg5[%c5, %c0_19] : memref<8x128xf32, #tpu.memory_space<vmem>>, vector<1x128xf32>
    %cst_20 = arith.constant dense<0.000000e+00> : vector<16xf32>
    %45 = vector.multi_reduction <add>, %42, %cst_20 [1] : vector<16x128xf32> to vector<16xf32>
    %46 = vector.shape_cast %45 : vector<16xf32> to vector<16x1xf32>
    %cst_21 = arith.constant 3.125000e-02 : f32
    %47 = vector.broadcast %cst_21 : f32 to vector<16x1xf32>
    %48 = arith.mulf %46, %47 : vector<16x1xf32>
    %49 = vector.broadcast %48 : vector<16x1xf32> to vector<16x128xf32>
    %50 = arith.subf %42, %49 : vector<16x128xf32>
    %51 = tpu.iota {dimensions = array<i32: 1>} : vector<1x128xi32>
    %c32_i32 = arith.constant 32 : i32
    %52 = vector.broadcast %c32_i32 : i32 to vector<1x128xi32>
    %53 = arith.cmpi slt, %51, %52 : vector<1x128xi32>
    %cst_22 = arith.constant 0.000000e+00 : f32
    %54 = vector.shape_cast %53 : vector<1x128xi1> to vector<1x128xi1>
    %55 = vector.broadcast %54 : vector<1x128xi1> to vector<16x128xi1>
    %56 = vector.broadcast %cst_22 : f32 to vector<16x128xf32>
    %57 = arith.select %55, %50, %56 : vector<16x128xi1>, vector<16x128xf32>
    %58 = arith.mulf %57, %57 : vector<16x128xf32>
    %cst_23 = arith.constant dense<0.000000e+00> : vector<16xf32>
    %59 = vector.multi_reduction <add>, %58, %cst_23 [1] : vector<16x128xf32> to vector<16xf32>
    %60 = vector.shape_cast %59 : vector<16xf32> to vector<16x1xf32>
    %cst_24 = arith.constant 3.125000e-02 : f32
    %61 = vector.broadcast %cst_24 : f32 to vector<16x1xf32>
    %62 = arith.mulf %60, %61 : vector<16x1xf32>
    %cst_25 = arith.constant 9.99999974E-6 : f32
    %63 = vector.broadcast %cst_25 : f32 to vector<16x1xf32>
    %64 = arith.addf %62, %63 : vector<16x1xf32>
    %65 = math.rsqrt %64 : vector<16x1xf32>
    %66 = vector.broadcast %65 : vector<16x1xf32> to vector<16x128xf32>
    %67 = arith.mulf %57, %66 : vector<16x128xf32>
    %68 = vector.broadcast %43 : vector<1x128xf32> to vector<16x128xf32>
    %69 = arith.mulf %67, %68 : vector<16x128xf32>
    %70 = vector.broadcast %44 : vector<1x128xf32> to vector<16x128xf32>
    %71 = arith.addf %69, %70 : vector<16x128xf32>
    %cst_26 = arith.constant 0.000000e+00 : f32
    %72 = vector.broadcast %cst_26 : f32 to vector<16x128xf32>
    %73 = arith.maximumf %71, %72 : vector<16x128xf32>
    %74 = arith.truncf %73 : vector<16x128xf32> to vector<16x128xbf16>
    %c0_27 = arith.constant 0 : index
    %c0_28 = arith.constant 0 : index
    %75 = vector.load %arg4[%c0_27, %c0_28] : memref<128x128xbf16, #tpu.memory_space<vmem>>, vector<128x128xbf16>
    %cst_29 = arith.constant dense<0.000000e+00> : vector<16x128xf32>
    %76 = tpu.matmul %74, %75, %cst_29 {dimension_numbers = #tpu.dot_dimension_numbers<[1], [0], [0], [1], [0, 0, 1, 1], [], []>} : vector<16x128xbf16>, vector<128x128xbf16>, vector<16x128xf32> -> vector<16x128xf32>
    %c6 = arith.constant 6 : index
    %c0_30 = arith.constant 0 : index
    %77 = vector.load %arg5[%c6, %c0_30] : memref<8x128xf32, #tpu.memory_space<vmem>>, vector<1x128xf32>
    %78 = vector.broadcast %77 : vector<1x128xf32> to vector<16x128xf32>
    %79 = arith.addf %76, %78 : vector<16x128xf32>
    %80 = math.tanh %79 : vector<16x128xf32>
    %c0_31 = arith.constant 0 : index
    %c0_32 = arith.constant 0 : index
    %81 = vector.load %arg6[%c0_31, %c0_32] : memref<16x128xf32, #tpu.memory_space<vmem>>, vector<16x128xf32>
    tpu.vector_store %arg6[%c0_31, %c0_32], %80 {strides = array<i32>} : memref<16x128xf32, #tpu.memory_space<vmem>>, vector<16x128xf32>,
    return
  }
  func.func @transform_0(%arg0: i32) -> (i32, i32) {
    %c0_i32 = arith.constant 0 : i32
    %c0_i32_0 = arith.constant 0 : i32
    return %arg0, %c0_i32 : i32, i32
  }
  func.func @transform_1(%arg0: i32) -> (i32, i32) {
    %c0_i32 = arith.constant 0 : i32
    %c0_i32_0 = arith.constant 0 : i32
    %c0_i32_1 = arith.constant 0 : i32
    return %c0_i32, %c0_i32_0 : i32, i32
  }
  func.func @transform_2(%arg0: i32) -> (i32, i32) {
    %c0_i32 = arith.constant 0 : i32
    %c0_i32_0 = arith.constant 0 : i32
    %c0_i32_1 = arith.constant 0 : i32
    return %c0_i32, %c0_i32_0 : i32, i32
  }
  func.func @transform_3(%arg0: i32) -> (i32, i32) {
    %c0_i32 = arith.constant 0 : i32
    %c0_i32_0 = arith.constant 0 : i32
    %c0_i32_1 = arith.constant 0 : i32
    return %c0_i32, %c0_i32_0 : i32, i32
  }
  func.func @transform_4(%arg0: i32) -> (i32, i32) {
    %c0_i32 = arith.constant 0 : i32
    %c0_i32_0 = arith.constant 0 : i32
    %c0_i32_1 = arith.constant 0 : i32
    return %c0_i32, %c0_i32_0 : i32, i32
  }
  func.func @transform_5(%arg0: i32) -> (i32, i32) {
    %c0_i32 = arith.constant 0 : i32
    %c0_i32_0 = arith.constant 0 : i32
    return %arg0, %c0_i32 : i32, i32
  }
}

module attributes {stable_mosaic.version = 11 : i64} {
  func.func @kernel(%arg0: i32, %arg1: memref<16x16xbf16, #tpu.memory_space<vmem>>, %arg2: memref<16x128xbf16, #tpu.memory_space<vmem>>, %arg3: memref<128x128xbf16, #tpu.memory_space<vmem>>, %arg4: memref<128x128xbf16, #tpu.memory_space<vmem>>, %arg5: memref<8x128xf32, #tpu.memory_space<vmem>>, %arg6: memref<16x128xf32, #tpu.memory_space<vmem>>) attributes {dimension_semantics = [#tpu.dimension_semantics<parallel>], iteration_bounds = array<i64: 1>, scalar_prefetch = 0 : i64, scratch_operands = 0 : i64, tpu.core_type = #tpu.core_type<tc>, window_params = [{transform_indices = @transform_0, window_bounds = array<i64: 16, 16>}, {pipeline_mode = #tpu.pipeline_mode<synchronous>, transform_indices = @transform_1, window_bounds = array<i64: 16, 128>}, {pipeline_mode = #tpu.pipeline_mode<synchronous>, transform_indices = @transform_2, window_bounds = array<i64: 128, 128>}, {pipeline_mode = #tpu.pipeline_mode<synchronous>, transform_indices = @transform_3, window_bounds = array<i64: 128, 128>}, {pipeline_mode = #tpu.pipeline_mode<synchronous>, transform_indices = @transform_4, window_bounds = array<i64: 8, 128>}, {transform_indices = @transform_5, window_bounds = array<i64: 16, 128>}]} {
    %c0 = arith.constant 0 : index
    %c0_0 = arith.constant 0 : index
    %0 = vector.load %arg1[%c0, %c0_0] : memref<16x16xbf16, #tpu.memory_space<vmem>>, vector<16x16xbf16>
    %c0_1 = arith.constant 0 : index
    %c0_2 = arith.constant 0 : index
    %1 = vector.load %arg2[%c0_1, %c0_2] : memref<16x128xbf16, #tpu.memory_space<vmem>>, vector<16x128xbf16>
    %cst = arith.constant dense<0.000000e+00> : vector<16x128xf32>
    %2 = tpu.matmul %0, %1, %cst {dimension_numbers = #tpu.dot_dimension_numbers<[1], [0], [0], [1], [0, 0, 1, 1], [], []>} : vector<16x16xbf16>, vector<16x128xbf16>, vector<16x128xf32> -> vector<16x128xf32>
    %c0_3 = arith.constant 0 : index
    %c0_4 = arith.constant 0 : index
    %3 = vector.load %arg5[%c0_3, %c0_4] : memref<8x128xf32, #tpu.memory_space<vmem>>, vector<1x128xf32>
    %4 = vector.broadcast %3 : vector<1x128xf32> to vector<16x128xf32>
    %5 = arith.addf %2, %4 : vector<16x128xf32>
    %c1 = arith.constant 1 : index
    %c0_5 = arith.constant 0 : index
    %6 = vector.load %arg5[%c1, %c0_5] : memref<8x128xf32, #tpu.memory_space<vmem>>, vector<1x128xf32>
    %c2 = arith.constant 2 : index
    %c0_6 = arith.constant 0 : index
    %7 = vector.load %arg5[%c2, %c0_6] : memref<8x128xf32, #tpu.memory_space<vmem>>, vector<1x128xf32>
    %cst_7 = arith.constant dense<0.000000e+00> : vector<16xf32>
    %8 = vector.multi_reduction <add>, %5, %cst_7 [1] : vector<16x128xf32> to vector<16xf32>
    %9 = vector.shape_cast %8 : vector<16xf32> to vector<16x1xf32>
    %cst_8 = arith.constant 1.562500e-02 : f32
    %10 = vector.broadcast %cst_8 : f32 to vector<16x1xf32>
    %11 = arith.mulf %9, %10 : vector<16x1xf32>
    %12 = vector.broadcast %11 : vector<16x1xf32> to vector<16x128xf32>
    %13 = arith.subf %5, %12 : vector<16x128xf32>
    %14 = tpu.iota {dimensions = array<i32: 1>} : vector<1x128xi32>
    %c64_i32 = arith.constant 64 : i32
    %15 = vector.broadcast %c64_i32 : i32 to vector<1x128xi32>
    %16 = arith.cmpi slt, %14, %15 : vector<1x128xi32>
    %cst_9 = arith.constant 0.000000e+00 : f32
    %17 = vector.shape_cast %16 : vector<1x128xi1> to vector<1x128xi1>
    %18 = vector.broadcast %17 : vector<1x128xi1> to vector<16x128xi1>
    %19 = vector.broadcast %cst_9 : f32 to vector<16x128xf32>
    %20 = arith.select %18, %13, %19 : vector<16x128xi1>, vector<16x128xf32>
    %21 = arith.mulf %20, %20 : vector<16x128xf32>
    %cst_10 = arith.constant dense<0.000000e+00> : vector<16xf32>
    %22 = vector.multi_reduction <add>, %21, %cst_10 [1] : vector<16x128xf32> to vector<16xf32>
    %23 = vector.shape_cast %22 : vector<16xf32> to vector<16x1xf32>
    %cst_11 = arith.constant 1.562500e-02 : f32
    %24 = vector.broadcast %cst_11 : f32 to vector<16x1xf32>
    %25 = arith.mulf %23, %24 : vector<16x1xf32>
    %cst_12 = arith.constant 9.99999974E-6 : f32
    %26 = vector.broadcast %cst_12 : f32 to vector<16x1xf32>
    %27 = arith.addf %25, %26 : vector<16x1xf32>
    %28 = math.rsqrt %27 : vector<16x1xf32>
    %29 = vector.broadcast %28 : vector<16x1xf32> to vector<16x128xf32>
    %30 = arith.mulf %20, %29 : vector<16x128xf32>
    %31 = vector.broadcast %6 : vector<1x128xf32> to vector<16x128xf32>
    %32 = arith.mulf %30, %31 : vector<16x128xf32>
    %33 = vector.broadcast %7 : vector<1x128xf32> to vector<16x128xf32>
    %34 = arith.addf %32, %33 : vector<16x128xf32>
    %cst_13 = arith.constant 0.000000e+00 : f32
    %35 = vector.broadcast %cst_13 : f32 to vector<16x128xf32>
    %36 = arith.maximumf %34, %35 : vector<16x128xf32>
    %37 = arith.truncf %36 : vector<16x128xf32> to vector<16x128xbf16>
    %c0_14 = arith.constant 0 : index
    %c0_15 = arith.constant 0 : index
    %38 = vector.load %arg3[%c0_14, %c0_15] : memref<128x128xbf16, #tpu.memory_space<vmem>>, vector<128x128xbf16>
    %cst_16 = arith.constant dense<0.000000e+00> : vector<16x128xf32>
    %39 = tpu.matmul %37, %38, %cst_16 {dimension_numbers = #tpu.dot_dimension_numbers<[1], [0], [0], [1], [0, 0, 1, 1], [], []>} : vector<16x128xbf16>, vector<128x128xbf16>, vector<16x128xf32> -> vector<16x128xf32>
    %c3 = arith.constant 3 : index
    %c0_17 = arith.constant 0 : index
    %40 = vector.load %arg5[%c3, %c0_17] : memref<8x128xf32, #tpu.memory_space<vmem>>, vector<1x128xf32>
    %41 = vector.broadcast %40 : vector<1x128xf32> to vector<16x128xf32>
    %42 = arith.addf %39, %41 : vector<16x128xf32>
    %c4 = arith.constant 4 : index
    %c0_18 = arith.constant 0 : index
    %43 = vector.load %arg5[%c4, %c0_18] : memref<8x128xf32, #tpu.memory_space<vmem>>, vector<1x128xf32>
    %c5 = arith.constant 5 : index
    %c0_19 = arith.constant 0 : index
    %44 = vector.load %arg5[%c5, %c0_19] : memref<8x128xf32, #tpu.memory_space<vmem>>, vector<1x128xf32>
    %cst_20 = arith.constant dense<0.000000e+00> : vector<16xf32>
    %45 = vector.multi_reduction <add>, %42, %cst_20 [1] : vector<16x128xf32> to vector<16xf32>
    %46 = vector.shape_cast %45 : vector<16xf32> to vector<16x1xf32>
    %cst_21 = arith.constant 3.125000e-02 : f32
    %47 = vector.broadcast %cst_21 : f32 to vector<16x1xf32>
    %48 = arith.mulf %46, %47 : vector<16x1xf32>
    %49 = vector.broadcast %48 : vector<16x1xf32> to vector<16x128xf32>
    %50 = arith.subf %42, %49 : vector<16x128xf32>
    %51 = tpu.iota {dimensions = array<i32: 1>} : vector<1x128xi32>
    %c32_i32 = arith.constant 32 : i32
    %52 = vector.broadcast %c32_i32 : i32 to vector<1x128xi32>
    %53 = arith.cmpi slt, %51, %52 : vector<1x128xi32>
    %cst_22 = arith.constant 0.000000e+00 : f32
    %54 = vector.shape_cast %53 : vector<1x128xi1> to vector<1x128xi1>
    %55 = vector.broadcast %54 : vector<1x128xi1> to vector<16x128xi1>
    %56 = vector.broadcast %cst_22 : f32 to vector<16x128xf32>
    %57 = arith.select %55, %50, %56 : vector<16x128xi1>, vector<16x128xf32>
    %58 = arith.mulf %57, %57 : vector<16x128xf32>
    %cst_23 = arith.constant dense<0.000000e+00> : vector<16xf32>
    %59 = vector.multi_reduction <add>, %58, %cst_23 [1] : vector<16x128xf32> to vector<16xf32>
    %60 = vector.shape_cast %59 : vector<16xf32> to vector<16x1xf32>
    %cst_24 = arith.constant 3.125000e-02 : f32
    %61 = vector.broadcast %cst_24 : f32 to vector<16x1xf32>
    %62 = arith.mulf %60, %61 : vector<16x1xf32>
    %cst_25 = arith.constant 9.99999974E-6 : f32
    %63 = vector.broadcast %cst_25 : f32 to vector<16x1xf32>
    %64 = arith.addf %62, %63 : vector<16x1xf32>
    %65 = math.rsqrt %64 : vector<16x1xf32>
    %66 = vector.broadcast %65 : vector<16x1xf32> to vector<16x128xf32>
    %67 = arith.mulf %57, %66 : vector<16x128xf32>
    %68 = vector.broadcast %43 : vector<1x128xf32> to vector<16x128xf32>
    %69 = arith.mulf %67, %68 : vector<16x128xf32>
    %70 = vector.broadcast %44 : vector<1x128xf32> to vector<16x128xf32>
    %71 = arith.addf %69, %70 : vector<16x128xf32>
    %cst_26 = arith.constant 0.000000e+00 : f32
    %72 = vector.broadcast %cst_26 : f32 to vector<16x128xf32>
    %73 = arith.maximumf %71, %72 : vector<16x128xf32>
    %74 = arith.truncf %73 : vector<16x128xf32> to vector<16x128xbf16>
    %c0_27 = arith.constant 0 : index
    %c0_28 = arith.constant 0 : index
    %75 = vector.load %arg4[%c0_27, %c0_28] : memref<128x128xbf16, #tpu.memory_space<vmem>>, vector<128x128xbf16>
    %cst_29 = arith.constant dense<0.000000e+00> : vector<16x128xf32>
    %76 = tpu.matmul %74, %75, %cst_29 {dimension_numbers = #tpu.dot_dimension_numbers<[1], [0], [0], [1], [0, 0, 1, 1], [], []>} : vector<16x128xbf16>, vector<128x128xbf16>, vector<16x128xf32> -> vector<16x128xf32>
    %c6 = arith.constant 6 : index
    %c0_30 = arith.constant 0 : index
    %77 = vector.load %arg5[%c6, %c0_30] : memref<8x128xf32, #tpu.memory_space<vmem>>, vector<1x128xf32>
    %78 = vector.broadcast %77 : vector<1x128xf32> to vector<16x128xf32>
    %79 = arith.addf %76, %78 : vector<16x128xf32>
    %80 = math.tanh %79 : vector<16x128xf32>
    %c0_31 = arith.constant 0 : index
    %c0_32 = arith.constant 0 : index
    %81 = vector.load %arg6[%c0_31, %c0_32] : memref<16x128xf32, #tpu.memory_space<vmem>>, vector<16x128xf32>
    tpu.vector_store %arg6[%c0_31, %c0_32], %80 {strides = array<i32>} : memref<16x128xf32, #tpu.memory_space<vmem>>, vector<16x128xf32>,
    return
  }
  func.func @transform_0(%arg0: i32) -> (i32, i32) {
    %c0_i32 = arith.constant 0 : i32
    %c0_i32_0 = arith.constant 0 : i32
    return %arg0, %c0_i32 : i32, i32
  }
  func.func @transform_1(%arg0: i32) -> (i32, i32) {
    %c0_i32 = arith.constant 0 : i32
    %c0_i32_0 = arith.constant 0 : i32
    %c0_i32_1 = arith.constant 0 : i32
    return %c0_i32, %c0_i32_0 : i32, i32
  }
  func.func @transform_2(%arg0: i32) -> (i32, i32) {
    %c0_i32 = arith.constant 0 : i32
    %c0_i32_0 = arith.constant 0 : i32
    %c0_i32_1 = arith.constant 0 : i32
    return %c0_i32, %c0_i32_0 : i32, i32
  }
  func.func @transform_3(%arg0: i32) -> (i32, i32) {
    %c0_i32 = arith.constant 0 : i32
    %c0_i32_0 = arith.constant 0 : i32
    %c0_i32_1 = arith.constant 0 : i32
    return %c0_i32, %c0_i32_0 : i32, i32
  }
  func.func @transform_4(%arg0: i32) -> (i32, i32) {
    %c0_i32 = arith.constant 0 : i32
    %c0_i32_0 = arith.constant 0 : i32
    %c0_i32_1 = arith.constant 0 : i32
    return %c0_i32, %c0_i32_0 : i32, i32
  }
  func.func @transform_5(%arg0: i32) -> (i32, i32) {
    %c0_i32 = arith.constant 0 : i32
    %c0_i32_0 = arith.constant 0 : i32
    return %arg0, %c0_i32 : i32, i32
  }
}

</mosaic_0001>

<llo_original>
// kernel: tpu_custom_call.1
$region0: #{tpu_custom_call.1}
  #allocation0 [shape = 'u32[]', space=smem, size = 0x4, offset = 0x4, fixed_abs, tag = 'smem constant byte address 0x4 - core index']
  #allocation1 [shape = 'u32[72,128]{1,0:T(1,128)}', space=vmem, size = 0x9000, scoped, tag = 'internal scratch']
  %s0 = inlined_call_operand.hbm [shape: bf16[16,16], index: 0, kind: input, shape index: {}]
  %s1 = inlined_call_operand.hbm [shape: bf16[16,128], index: 1, kind: input, shape index: {}]
  %s2 = inlined_call_operand.hbm [shape: bf16[128,128], index: 2, kind: input, shape index: {}]
  %s3 = inlined_call_operand.hbm [shape: bf16[128,128], index: 3, kind: input, shape index: {}]
  %s4 = inlined_call_operand.hbm [shape: f32[8,128], index: 4, kind: input, shape index: {}]
  %s5 = inlined_call_operand.hbm [shape: f32[16,128], index: 5, kind: output, shape index: {}]
  %s6 = sld [smem:[#allocation0]]
  $region50: #{tpu_custom_call.1} parent=0
    _
  %s8 = ssub.s32 1, %s6
  %s9 = scalar_select 0, %s8, %s6
  $region1: #{tpu_custom_call.1} parent=0
    #allocation2 [shape = 'u8[4096]{0}', space=vmem, size = 0x1000, scoped, tag = 'input window, operand 0, single buffered']
    #allocation3 [shape = 's32[1]{0}', space=sflag, size = 0x4, scoped, tag = 'scoped memory for tpu_custom_call.1']
    #allocation4 [shape = 's32[1]{0}', space=sflag, size = 0x4, scoped, tag = 'scoped memory for tpu_custom_call.1']
    #allocation5 [shape = 'u8[4096]{0}', space=vmem, size = 0x1000, scoped, tag = 'input window, operand 1, single buffered']
    #allocation6 [shape = 's32[1]{0}', space=sflag, size = 0x4, scoped, tag = 'scoped memory for tpu_custom_call.1']
    #allocation7 [shape = 'u8[32768]{0}', space=vmem, size = 0x8000, scoped, tag = 'input window, operand 2, single buffered']
    #allocation8 [shape = 'u8[32768]{0}', space=vmem, size = 0x8000, scoped, tag = 'input window, operand 3, single buffered']
    #allocation9 [shape = 's32[1]{0}', space=sflag, size = 0x4, scoped, tag = 'scoped memory for tpu_custom_call.1']
    #allocation10 [shape = 'u8[4096]{0}', space=vmem, size = 0x1000, scoped, tag = 'input window, operand 4, single buffered']
    #allocation11 [shape = 'u8[8192]{0}', space=vmem, size = 0x2000, scoped, tag = 'output window, operand 0, single buffered']
    %10 = vsyncpa [#allocation3], 0
    %11 = vsyncpa [#allocation6], 0
    %12 = vsyncpa [#allocation9], 0
    %13 = vsyncpa [#allocation4], 0
    // Predicated region
    $region2: #{tpu_custom_call.1} parent=1 // pred_check
      _
    $region3: #{tpu_custom_call.1} parent=1 // pred_check_branch
      %15 = sbr.rel (0) target = $region5
    $region4: #{tpu_custom_call.1} parent=1 // pred_region
      %17 = vsyncadd [#allocation3], 0
      %s18 = sshll.u32 %s0, 4
      %s19 = int_to_ptr.hbm [resolvable:$true] %s18
      %s20 = sshll.u32 [#allocation2], 4
      %s21 = int_to_ptr.vmem [resolvable:$true] %s20
      %26 = dma.hbm_to_vmem [thread:$0]  %s19, 128, %s21, [#allocation3], 64, 64, 4
    $region5: #{tpu_custom_call.1} parent=1 // pred_fallthru
      _
    // Predicated region
    $region6: #{tpu_custom_call.1} parent=1 // pred_check
      _
    $region7: #{tpu_custom_call.1} parent=1 // pred_check_branch
      %28 = sbr.rel (0) target = $region9
    $region8: #{tpu_custom_call.1} parent=1 // pred_region
      %30 = vsyncadd [#allocation6], 0
      %s31 = sshll.u32 %s1, 4
      %s32 = int_to_ptr.hbm [resolvable:$true] %s31
      %s33 = sshll.u32 [#allocation5], 4
      %s34 = int_to_ptr.vmem [resolvable:$true] %s33
      %39 = dma.hbm_to_vmem [thread:$0]  %s32, 128, %s34, [#allocation6], 64, 64, 4
    $region9: #{tpu_custom_call.1} parent=1 // pred_fallthru
      _
    // Predicated region
    $region10: #{tpu_custom_call.1} parent=1 // pred_check
      _
    $region11: #{tpu_custom_call.1} parent=1 // pred_check_branch
      %41 = sbr.rel (0) target = $region13
    $region12: #{tpu_custom_call.1} parent=1 // pred_region
      %43 = vsyncadd [#allocation6], 0
      %s44 = sshll.u32 %s2, 4
      %s45 = int_to_ptr.hbm [resolvable:$true] %s44
      %s46 = sshll.u32 [#allocation7], 4
      %s47 = int_to_ptr.vmem [resolvable:$true] %s46
      %52 = dma.hbm_to_vmem [thread:$0]  %s45, 1024, %s47, [#allocation6], 64, 64, 4
    $region13: #{tpu_custom_call.1} parent=1 // pred_fallthru
      _
    // Predicated region
    $region14: #{tpu_custom_call.1} parent=1 // pred_check
      _
    $region15: #{tpu_custom_call.1} parent=1 // pred_check_branch
      %54 = sbr.rel (0) target = $region17
    $region16: #{tpu_custom_call.1} parent=1 // pred_region
      %56 = vsyncadd [#allocation9], 0
      %s57 = sshll.u32 %s3, 4
      %s58 = int_to_ptr.hbm [resolvable:$true] %s57
      %s59 = sshll.u32 [#allocation8], 4
      %s60 = int_to_ptr.vmem [resolvable:$true] %s59
      %65 = dma.hbm_to_vmem [thread:$0]  %s58, 1024, %s60, [#allocation9], 64, 64, 4
    $region17: #{tpu_custom_call.1} parent=1 // pred_fallthru
      _
    // Predicated region
    $region18: #{tpu_custom_call.1} parent=1 // pred_check
      _
    $region19: #{tpu_custom_call.1} parent=1 // pred_check_branch
      %67 = sbr.rel (0) target = $region21
    $region20: #{tpu_custom_call.1} parent=1 // pred_region
      %69 = vsyncadd [#allocation9], 0
      %s71 = sshll.u32 %s4, 4
      %s72 = int_to_ptr.hbm [resolvable:$true] %s71
      %s73 = sshll.u32 [#allocation10], 4
      %s74 = int_to_ptr.vmem [resolvable:$true] %s73
      %76 = dma.hbm_to_vmem [thread:$0]  %s72, 128, %s74, [#allocation9]
    $region21: #{tpu_custom_call.1} parent=1 // pred_fallthru
      _
    // Predicated region
    $region22: #{tpu_custom_call.1} parent=1 // pred_check
      _
    $region23: #{tpu_custom_call.1} parent=1 // pred_check_branch
      %78 = sbr.rel (0) target = $region25
    $region24: #{tpu_custom_call.1} parent=1 // pred_region
      %80 = dma.done [#allocation3], 128
    $region25: #{tpu_custom_call.1} parent=1 // pred_fallthru
      _
    // Predicated region
    $region26: #{tpu_custom_call.1} parent=1 // pred_check
      _
    $region27: #{tpu_custom_call.1} parent=1 // pred_check_branch
      %82 = sbr.rel (0) target = $region29
    $region28: #{tpu_custom_call.1} parent=1 // pred_region
      %84 = dma.done [#allocation6], 128
    $region29: #{tpu_custom_call.1} parent=1 // pred_fallthru
      _
    // Predicated region
    $region30: #{tpu_custom_call.1} parent=1 // pred_check
      _
    $region31: #{tpu_custom_call.1} parent=1 // pred_check_branch
      %86 = sbr.rel (0) target = $region33
    $region32: #{tpu_custom_call.1} parent=1 // pred_region
      %88 = dma.done [#allocation6], 1024
    $region33: #{tpu_custom_call.1} parent=1 // pred_fallthru
      _
    // Predicated region
    $region34: #{tpu_custom_call.1} parent=1 // pred_check
      _
    $region35: #{tpu_custom_call.1} parent=1 // pred_check_branch
      %90 = sbr.rel (0) target = $region37
    $region36: #{tpu_custom_call.1} parent=1 // pred_region
      %92 = dma.done [#allocation9], 1024
    $region37: #{tpu_custom_call.1} parent=1 // pred_fallthru
      _
    // Predicated region
    $region38: #{tpu_custom_call.1} parent=1 // pred_check
      _
    $region39: #{tpu_custom_call.1} parent=1 // pred_check_branch
      %94 = sbr.rel (0) target = $region41
    $region40: #{tpu_custom_call.1} parent=1 // pred_region
      %96 = dma.done [#allocation9], 128
    $region41: #{tpu_custom_call.1} parent=1 // pred_fallthru
      _
    %v98 = vld [vmem:[#allocation2] sm:$0xf]
    %v99 = vld [vmem:[#allocation2 + $0x4] sm:$0xf]
    %v100 = vld [vmem:[#allocation5] sm:$0xf]
    %v101 = vld [vmem:[#allocation5 + $0x4] sm:$0xf]
    %v102 = vld [vmem:[#allocation10] sm:$0x1]
    %v103 = vperm.slane %v102, 0
    %v106 = vunpack.c.l.b16 %v98
    %v107 = vunpack.c.l.b16 %v99
    %v108 = vpack.c.b16 %v107, %v106
    %v111 = vunpack.c.l.b16 %v100
    %v112 = vunpack.c.l.b16 %v101
    %v113 = vpack.c.b16 %v112, %v111
    %vm115 = vcmask 130048
    %v117 = vsel %vm115, %v108, 0
    %119 = vmatpush.bf16.msra.mxu0 0
    %120 = vmatpush.bf16.msra.mxu0 0
    %121 = vmatpush.bf16.msra.mxu0 0
    %122 = vmatpush.bf16.msra.mxu0 0
    %123 = vmatpush.bf16.msra.mxu0 0
    %124 = vmatpush.bf16.msra.mxu0 0
    %125 = vmatpush.bf16.msra.mxu0 0
    %126 = vmatpush.bf16.msra.mxu0 %v113
    %127 = vmatmul.bf16.gmra.mxu0 %v117
    %v128 = vpop.f32.mrf.mxu0
    %v129 = vadd.f32 %v103, %v128
    %v130 = vpop.f32.mrf.mxu0
    %v131 = vadd.f32 %v103, %v130
    %132 = vdwg.mxu0
    %v133 = vld [vmem:[#allocation10 + $0x1] sm:$0x1]
    %v134 = vld [vmem:[#allocation10 + $0x2] sm:$0x1]
    %135 = vadd.xlane.f32.xlu0 %v129
    %v136 = vpop.xlane.xlu0 %135
    %137 = vadd.xlane.f32.xlu0 %v131
    %v138 = vpop.xlane.xlu0 %137
    %v139 = vmul.f32 %v136, 0.015625
    %v140 = vmul.f32 %v138, 0.015625
    %v141 = vsub.f32 %v129, %v139
    %v142 = vsub.f32 %v131, %v140
    %v143 = vlaneseq
    %v144 = vand.u32 %v143, 127
    %vm145 = vcmp.lt.s32.totalorder %v144, 64
    %v146 = vsel %vm145, 1, 0
    %vm147 = vcmp.eq.s32.totalorder %v146, 1
    %v148 = vsel %vm147, %v141, 0.0
    %v149 = vsel %vm147, %v142, 0.0
    %v150 = vmul.f32 %v148, %v148
    %v151 = vmul.f32 %v149, %v149
    %152 = vadd.xlane.f32.xlu0 %v150
    %v153 = vpop.xlane.xlu0 %152
    %154 = vadd.xlane.f32.xlu0 %v151
    %v155 = vpop.xlane.xlu0 %154
    %v156 = vmul.f32 %v153, 0.015625
    %v157 = vmul.f32 %v155, 0.015625
    %v158 = vadd.f32 %v156, 1e-05
    %v159 = vadd.f32 %v157, 1e-05
    %v160 = vrsqrt.pop %v158
    %v161 = vmul.f32 %v160, %v158
    %v162 = vmul.f32 %v161, %v160
    %v163 = vmul.f32 0.5, %v162
    %v164 = vsub.f32 1.5, %v163
    %v165 = vmul.f32 %v160, %v164
    %vm166 = vweird.f32 %v158
    %vm167 = vweird.f32 %v160
    %vm168 = vmor %vm166, %vm167
    %v169 = vsel %vm168, %v160, %v165
    %v170 = vrsqrt.pop %v159
    %v171 = vmul.f32 %v170, %v159
    %v172 = vmul.f32 %v171, %v170
    %v173 = vmul.f32 0.5, %v172
    %v174 = vsub.f32 1.5, %v173
    %v175 = vmul.f32 %v170, %v174
    %vm176 = vweird.f32 %v159
    %vm177 = vweird.f32 %v170
    %vm178 = vmor %vm176, %vm177
    %v179 = vsel %vm178, %v170, %v175
    %v180 = vmul.f32 %v148, %v169
    %v181 = vmul.f32 %v149, %v179
    %v182 = vperm.slane %v133, 0
    %v183 = vmul.f32 %v180, %v182
    %v184 = vmul.f32 %v181, %v182
    %v185 = vperm.slane %v134, 0
    %v186 = vadd.f32 %v183, %v185
    %v187 = vadd.f32 %v184, %v185
    %v188 = vmax.f32 %v186, 0.0
    %v189 = vmax.f32 %v187, 0.0
    %v190 = vpack.c.bf16 %v189, %v188
    %v191 = vld [vmem:[#allocation7] sm:$0xf]
    %v192 = vld [vmem:[#allocation7 + $0x4] sm:$0xf]
    %v193 = vld [vmem:[#allocation7 + $0x8] sm:$0xf]
    %v194 = vld [vmem:[#allocation7 + $0xc] sm:$0xf]
    %v195 = vld [vmem:[#allocation7 + $0x10] sm:$0xf]
    %v196 = vld [vmem:[#allocation7 + $0x14] sm:$0xf]
    %v197 = vld [vmem:[#allocation7 + $0x18] sm:$0xf]
    %v198 = vld [vmem:[#allocation7 + $0x1c] sm:$0xf]
    %v199 = vld [vmem:[#allocation7 + $0x20] sm:$0xf]
    %v200 = vld [vmem:[#allocation7 + $0x24] sm:$0xf]
    %v201 = vld [vmem:[#allocation7 + $0x28] sm:$0xf]
    %v202 = vld [vmem:[#allocation7 + $0x2c] sm:$0xf]
    %v203 = vld [vmem:[#allocation7 + $0x30] sm:$0xf]
    %v204 = vld [vmem:[#allocation7 + $0x34] sm:$0xf]
    %v205 = vld [vmem:[#allocation7 + $0x38] sm:$0xf]
    %v206 = vld [vmem:[#allocation7 + $0x3c] sm:$0xf]
    %v207 = vld [vmem:[#allocation10 + $0x3] sm:$0x1]
    %v208 = vperm.slane %v207, 0
    %v225 = vunpack.c.l.b16 %v191
    %v226 = vunpack.c.l.b16 %v192
    %v227 = vunpack.c.l.b16 %v193
    %v228 = vunpack.c.l.b16 %v194
    %v229 = vunpack.c.l.b16 %v195
    %v230 = vunpack.c.l.b16 %v196
    %v231 = vunpack.c.l.b16 %v197
    %v232 = vunpack.c.l.b16 %v198
    %v233 = vunpack.c.l.b16 %v199
    %v234 = vunpack.c.l.b16 %v200
    %v235 = vunpack.c.l.b16 %v201
    %v236 = vunpack.c.l.b16 %v202
    %v237 = vunpack.c.l.b16 %v203
    %v238 = vunpack.c.l.b16 %v204
    %v239 = vunpack.c.l.b16 %v205
    %v240 = vunpack.c.l.b16 %v206
    %v241 = vpack.c.b16 %v226, %v225
    %v242 = vpack.c.b16 %v228, %v227
    %v243 = vpack.c.b16 %v230, %v229
    %v244 = vpack.c.b16 %v232, %v231
    %v245 = vpack.c.b16 %v234, %v233
    %v246 = vpack.c.b16 %v236, %v235
    %v247 = vpack.c.b16 %v238, %v237
    %v248 = vpack.c.b16 %v240, %v239
    %257 = vmatpush.bf16.msra.mxu0 %v248
    %258 = vmatpush.bf16.msra.mxu0 %v247
    %259 = vmatpush.bf16.msra.mxu0 %v246
    %260 = vmatpush.bf16.msra.mxu0 %v245
    %261 = vmatpush.bf16.msra.mxu0 %v244
    %262 = vmatpush.bf16.msra.mxu0 %v243
    %263 = vmatpush.bf16.msra.mxu0 %v242
    %264 = vmatpush.bf16.msra.mxu0 %v241
    %265 = vmatmul.bf16.gmra.mxu0 %v190
    %v266 = vpop.f32.mrf.mxu0
    %v267 = vadd.f32 %v208, %v266
    %v268 = vpop.f32.mrf.mxu0
    %v269 = vadd.f32 %v208, %v268
    %270 = vdwg.mxu0
    %v271 = vld [vmem:[#allocation10 + $0x4] sm:$0x1]
    %v272 = vld [vmem:[#allocation10 + $0x5] sm:$0x1]
    %273 = vadd.xlane.f32.xlu0 %v267
    %v274 = vpop.xlane.xlu0 %273
    %275 = vadd.xlane.f32.xlu0 %v269
    %v276 = vpop.xlane.xlu0 %275
    %v277 = vmul.f32 %v274, 0.03125
    %v278 = vmul.f32 %v276, 0.03125
    %v279 = vsub.f32 %v267, %v277
    %v280 = vsub.f32 %v269, %v278
    %vm281 = vcmp.lt.s32.totalorder %v144, 32
    %v282 = vsel %vm281, 1, 0
    %vm283 = vcmp.eq.s32.totalorder %v282, 1
    %v284 = vsel %vm283, %v279, 0.0
    %v285 = vsel %vm283, %v280, 0.0
    %v286 = vmul.f32 %v284, %v284
    %v287 = vmul.f32 %v285, %v285
    %288 = vadd.xlane.f32.xlu0 %v286
    %v289 = vpop.xlane.xlu0 %288
    %290 = vadd.xlane.f32.xlu0 %v287
    %v291 = vpop.xlane.xlu0 %290
    %v292 = vmul.f32 %v289, 0.03125
    %v293 = vmul.f32 %v291, 0.03125
    %v294 = vadd.f32 %v292, 1e-05
    %v295 = vadd.f32 %v293, 1e-05
    %v296 = vrsqrt.pop %v294
    %v297 = vmul.f32 %v296, %v294
    %v298 = vmul.f32 %v297, %v296
    %v299 = vmul.f32 0.5, %v298
    %v300 = vsub.f32 1.5, %v299
    %v301 = vmul.f32 %v296, %v300
    %vm302 = vweird.f32 %v294
    %vm303 = vweird.f32 %v296
    %vm304 = vmor %vm302, %vm303
    %v305 = vsel %vm304, %v296, %v301
    %v306 = vrsqrt.pop %v295
    %v307 = vmul.f32 %v306, %v295
    %v308 = vmul.f32 %v307, %v306
    %v309 = vmul.f32 0.5, %v308
    %v310 = vsub.f32 1.5, %v309
    %v311 = vmul.f32 %v306, %v310
    %vm312 = vweird.f32 %v295
    %vm313 = vweird.f32 %v306
    %vm314 = vmor %vm312, %vm313
    %v315 = vsel %vm314, %v306, %v311
    %v316 = vmul.f32 %v284, %v305
    %v317 = vmul.f32 %v285, %v315
    %v318 = vperm.slane %v271, 0
    %v319 = vmul.f32 %v316, %v318
    %v320 = vmul.f32 %v317, %v318
    %v321 = vperm.slane %v272, 0
    %v322 = vadd.f32 %v319, %v321
    %v323 = vadd.f32 %v320, %v321
    %v324 = vmax.f32 %v322, 0.0
    %v325 = vmax.f32 %v323, 0.0
    %v326 = vpack.c.bf16 %v325, %v324
    %v327 = vld [vmem:[#allocation8] sm:$0xf]
    %v328 = vld [vmem:[#allocation8 + $0x4] sm:$0xf]
    %v329 = vld [vmem:[#allocation8 + $0x8] sm:$0xf]
    %v330 = vld [vmem:[#allocation8 + $0xc] sm:$0xf]
    %v331 = vld [vmem:[#allocation8 + $0x10] sm:$0xf]
    %v332 = vld [vmem:[#allocation8 + $0x14] sm:$0xf]
    %v333 = vld [vmem:[#allocation8 + $0x18] sm:$0xf]
    %v334 = vld [vmem:[#allocation8 + $0x1c] sm:$0xf]
    %v335 = vld [vmem:[#allocation8 + $0x20] sm:$0xf]
    %v336 = vld [vmem:[#allocation8 + $0x24] sm:$0xf]
    %v337 = vld [vmem:[#allocation8 + $0x28] sm:$0xf]
    %v338 = vld [vmem:[#allocation8 + $0x2c] sm:$0xf]
    %v339 = vld [vmem:[#allocation8 + $0x30] sm:$0xf]
    %v340 = vld [vmem:[#allocation8 + $0x34] sm:$0xf]
    %v341 = vld [vmem:[#allocation8 + $0x38] sm:$0xf]
    %v342 = vld [vmem:[#allocation8 + $0x3c] sm:$0xf]
    %v343 = vld [vmem:[#allocation10 + $0x6] sm:$0x1]
    %v344 = vperm.slane %v343, 0
    %v361 = vunpack.c.l.b16 %v327
    %v362 = vunpack.c.l.b16 %v328
    %v363 = vunpack.c.l.b16 %v329
    %v364 = vunpack.c.l.b16 %v330
    %v365 = vunpack.c.l.b16 %v331
    %v366 = vunpack.c.l.b16 %v332
    %v367 = vunpack.c.l.b16 %v333
    %v368 = vunpack.c.l.b16 %v334
    %v369 = vunpack.c.l.b16 %v335
    %v370 = vunpack.c.l.b16 %v336
    %v371 = vunpack.c.l.b16 %v337
    %v372 = vunpack.c.l.b16 %v338
    %v373 = vunpack.c.l.b16 %v339
    %v374 = vunpack.c.l.b16 %v340
    %v375 = vunpack.c.l.b16 %v341
    %v376 = vunpack.c.l.b16 %v342
    %v377 = vpack.c.b16 %v362, %v361
    %v378 = vpack.c.b16 %v364, %v363
    %v379 = vpack.c.b16 %v366, %v365
    %v380 = vpack.c.b16 %v368, %v367
    %v381 = vpack.c.b16 %v370, %v369
    %v382 = vpack.c.b16 %v372, %v371
    %v383 = vpack.c.b16 %v374, %v373
    %v384 = vpack.c.b16 %v376, %v375
    %393 = vmatpush.bf16.msra.mxu0 %v384
    %394 = vmatpush.bf16.msra.mxu0 %v383
    %395 = vmatpush.bf16.msra.mxu0 %v382
    %396 = vmatpush.bf16.msra.mxu0 %v381
    %397 = vmatpush.bf16.msra.mxu0 %v380
    %398 = vmatpush.bf16.msra.mxu0 %v379
    %399 = vmatpush.bf16.msra.mxu0 %v378
    %400 = vmatpush.bf16.msra.mxu0 %v377
    %401 = vmatmul.bf16.gmra.mxu0 %v326
    %v402 = vpop.f32.mrf.mxu0
    %v403 = vadd.f32 %v344, %v402
    %v404 = vpop.f32.mrf.mxu0
    %v405 = vadd.f32 %v344, %v404
    %406 = vdwg.mxu0
    %v407 = vtanh.pop %v403
    %v408 = vtanh.pop %v405
    %409 = vst [vmem:[#allocation11] sm:$0xff] %v407
    %410 = vst [vmem:[#allocation11 + $0x8] sm:$0xff] %v408
    // Predicated region
    $region42: #{tpu_custom_call.1} parent=1 // pred_check
      _
    $region43: #{tpu_custom_call.1} parent=1 // pred_check_branch
      %412 = sbr.rel (0) target = $region45
    $region44: #{tpu_custom_call.1} parent=1 // pred_region
      %414 = vsyncadd [#allocation4], 0
      %s415 = sshll.u32 [#allocation11], 4
      %s416 = int_to_ptr.vmem [resolvable:$true] %s415
      %s417 = sshll.u32 %s5, 4
      %s418 = int_to_ptr.hbm [resolvable:$true] %s417
      %423 = dma.vmem_to_hbm [thread:$0]  %s416, 256, %s418, [#allocation4], 128, 128, 8
    $region45: #{tpu_custom_call.1} parent=1 // pred_fallthru
      _
    // Predicated region
    $region46: #{tpu_custom_call.1} parent=1 // pred_check
      _
    $region47: #{tpu_custom_call.1} parent=1 // pred_check_branch
      %425 = sbr.rel (0) target = $region49
    $region48: #{tpu_custom_call.1} parent=1 // pred_region
      %427 = dma.done [#allocation4], 256
    $region49: #{tpu_custom_call.1} parent=1 // pred_fallthru
      _
    %428 = vsyncpa [#allocation3], 1
    %429 = vsyncpa [#allocation6], 1
    %430 = vsyncpa [#allocation9], 1
    %431 = vsyncpa [#allocation4], 1

// kernel: tpu_custom_call.1
$region0: #{tpu_custom_call.1}
  #allocation0 [shape = 'u32[]', space=smem, size = 0x4, offset = 0x4, fixed_abs, tag = 'smem constant byte address 0x4 - core index']
  #allocation1 [shape = 'u32[72,128]{1,0:T(1,128)}', space=vmem, size = 0x9000, scoped, tag = 'internal scratch']
  %s0 = inlined_call_operand.hbm [shape: bf16[16,16], index: 0, kind: input, shape index: {}]
  %s1 = inlined_call_operand.hbm [shape: bf16[16,128], index: 1, kind: input, shape index: {}]
  %s2 = inlined_call_operand.hbm [shape: bf16[128,128], index: 2, kind: input, shape index: {}]
  %s3 = inlined_call_operand.hbm [shape: bf16[128,128], index: 3, kind: input, shape index: {}]
  %s4 = inlined_call_operand.hbm [shape: f32[8,128], index: 4, kind: input, shape index: {}]
  %s5 = inlined_call_operand.hbm [shape: f32[16,128], index: 5, kind: output, shape index: {}]
  %s6 = sld [smem:[#allocation0]]
  $region50: #{tpu_custom_call.1} parent=0
    _
  %s8 = ssub.s32 1, %s6
  %s9 = scalar_select 0, %s8, %s6
  $region1: #{tpu_custom_call.1} parent=0
    #allocation2 [shape = 'u8[4096]{0}', space=vmem, size = 0x1000, scoped, tag = 'input window, operand 0, single buffered']
    #allocation3 [shape = 's32[1]{0}', space=sflag, size = 0x4, scoped, tag = 'scoped memory for tpu_custom_call.1']
    #allocation4 [shape = 's32[1]{0}', space=sflag, size = 0x4, scoped, tag = 'scoped memory for tpu_custom_call.1']
    #allocation5 [shape = 'u8[4096]{0}', space=vmem, size = 0x1000, scoped, tag = 'input window, operand 1, single buffered']
    #allocation6 [shape = 's32[1]{0}', space=sflag, size = 0x4, scoped, tag = 'scoped memory for tpu_custom_call.1']
    #allocation7 [shape = 'u8[32768]{0}', space=vmem, size = 0x8000, scoped, tag = 'input window, operand 2, single buffered']
    #allocation8 [shape = 'u8[32768]{0}', space=vmem, size = 0x8000, scoped, tag = 'input window, operand 3, single buffered']
    #allocation9 [shape = 's32[1]{0}', space=sflag, size = 0x4, scoped, tag = 'scoped memory for tpu_custom_call.1']
    #allocation10 [shape = 'u8[4096]{0}', space=vmem, size = 0x1000, scoped, tag = 'input window, operand 4, single buffered']
    #allocation11 [shape = 'u8[8192]{0}', space=vmem, size = 0x2000, scoped, tag = 'output window, operand 0, single buffered']
    %10 = vsyncpa [#allocation3], 0
    %11 = vsyncpa [#allocation6], 0
    %12 = vsyncpa [#allocation9], 0
    %13 = vsyncpa [#allocation4], 0
    // Predicated region
    $region2: #{tpu_custom_call.1} parent=1 // pred_check
      _
    $region3: #{tpu_custom_call.1} parent=1 // pred_check_branch
      %15 = sbr.rel (0) target = $region5
    $region4: #{tpu_custom_call.1} parent=1 // pred_region
      %17 = vsyncadd [#allocation3], 0
      %s18 = sshll.u32 %s0, 4
      %s19 = int_to_ptr.hbm [resolvable:$true] %s18
      %s20 = sshll.u32 [#allocation2], 4
      %s21 = int_to_ptr.vmem [resolvable:$true] %s20
      %26 = dma.hbm_to_vmem [thread:$0]  %s19, 128, %s21, [#allocation3], 64, 64, 4
    $region5: #{tpu_custom_call.1} parent=1 // pred_fallthru
      _
    // Predicated region
    $region6: #{tpu_custom_call.1} parent=1 // pred_check
      _
    $region7: #{tpu_custom_call.1} parent=1 // pred_check_branch
      %28 = sbr.rel (0) target = $region9
    $region8: #{tpu_custom_call.1} parent=1 // pred_region
      %30 = vsyncadd [#allocation6], 0
      %s31 = sshll.u32 %s1, 4
      %s32 = int_to_ptr.hbm [resolvable:$true] %s31
      %s33 = sshll.u32 [#allocation5], 4
      %s34 = int_to_ptr.vmem [resolvable:$true] %s33
      %39 = dma.hbm_to_vmem [thread:$0]  %s32, 128, %s34, [#allocation6], 64, 64, 4
    $region9: #{tpu_custom_call.1} parent=1 // pred_fallthru
      _
    // Predicated region
    $region10: #{tpu_custom_call.1} parent=1 // pred_check
      _
    $region11: #{tpu_custom_call.1} parent=1 // pred_check_branch
      %41 = sbr.rel (0) target = $region13
    $region12: #{tpu_custom_call.1} parent=1 // pred_region
      %43 = vsyncadd [#allocation6], 0
      %s44 = sshll.u32 %s2, 4
      %s45 = int_to_ptr.hbm [resolvable:$true] %s44
      %s46 = sshll.u32 [#allocation7], 4
      %s47 = int_to_ptr.vmem [resolvable:$true] %s46
      %52 = dma.hbm_to_vmem [thread:$0]  %s45, 1024, %s47, [#allocation6], 64, 64, 4
    $region13: #{tpu_custom_call.1} parent=1 // pred_fallthru
      _
    // Predicated region
    $region14: #{tpu_custom_call.1} parent=1 // pred_check
      _
    $region15: #{tpu_custom_call.1} parent=1 // pred_check_branch
      %54 = sbr.rel (0) target = $region17
    $region16: #{tpu_custom_call.1} parent=1 // pred_region
      %56 = vsyncadd [#allocation9], 0
      %s57 = sshll.u32 %s3, 4
      %s58 = int_to_ptr.hbm [resolvable:$true] %s57
      %s59 = sshll.u32 [#allocation8], 4
      %s60 = int_to_ptr.vmem [resolvable:$true] %s59
      %65 = dma.hbm_to_vmem [thread:$0]  %s58, 1024, %s60, [#allocation9], 64, 64, 4
    $region17: #{tpu_custom_call.1} parent=1 // pred_fallthru
      _
    // Predicated region
    $region18: #{tpu_custom_call.1} parent=1 // pred_check
      _
    $region19: #{tpu_custom_call.1} parent=1 // pred_check_branch
      %67 = sbr.rel (0) target = $region21
    $region20: #{tpu_custom_call.1} parent=1 // pred_region
      %69 = vsyncadd [#allocation9], 0
      %s71 = sshll.u32 %s4, 4
      %s72 = int_to_ptr.hbm [resolvable:$true] %s71
      %s73 = sshll.u32 [#allocation10], 4
      %s74 = int_to_ptr.vmem [resolvable:$true] %s73
      %76 = dma.hbm_to_vmem [thread:$0]  %s72, 128, %s74, [#allocation9]
    $region21: #{tpu_custom_call.1} parent=1 // pred_fallthru
      _
    // Predicated region
    $region22: #{tpu_custom_call.1} parent=1 // pred_check
      _
    $region23: #{tpu_custom_call.1} parent=1 // pred_check_branch
      %78 = sbr.rel (0) target = $region25
    $region24: #{tpu_custom_call.1} parent=1 // pred_region
      %80 = dma.done [#allocation3], 128
    $region25: #{tpu_custom_call.1} parent=1 // pred_fallthru
      _
    // Predicated region
    $region26: #{tpu_custom_call.1} parent=1 // pred_check
      _
    $region27: #{tpu_custom_call.1} parent=1 // pred_check_branch
      %82 = sbr.rel (0) target = $region29
    $region28: #{tpu_custom_call.1} parent=1 // pred_region
      %84 = dma.done [#allocation6], 128
    $region29: #{tpu_custom_call.1} parent=1 // pred_fallthru
      _
    // Predicated region
    $region30: #{tpu_custom_call.1} parent=1 // pred_check
      _
    $region31: #{tpu_custom_call.1} parent=1 // pred_check_branch
      %86 = sbr.rel (0) target = $region33
    $region32: #{tpu_custom_call.1} parent=1 // pred_region
      %88 = dma.done [#allocation6], 1024
    $region33: #{tpu_custom_call.1} parent=1 // pred_fallthru
      _
    // Predicated region
    $region34: #{tpu_custom_call.1} parent=1 // pred_check
      _
    $region35: #{tpu_custom_call.1} parent=1 // pred_check_branch
      %90 = sbr.rel (0) target = $region37
    $region36: #{tpu_custom_call.1} parent=1 // pred_region
      %92 = dma.done [#allocation9], 1024
    $region37: #{tpu_custom_call.1} parent=1 // pred_fallthru
      _
    // Predicated region
    $region38: #{tpu_custom_call.1} parent=1 // pred_check
      _
    $region39: #{tpu_custom_call.1} parent=1 // pred_check_branch
      %94 = sbr.rel (0) target = $region41
    $region40: #{tpu_custom_call.1} parent=1 // pred_region
      %96 = dma.done [#allocation9], 128
    $region41: #{tpu_custom_call.1} parent=1 // pred_fallthru
      _
    %v98 = vld [vmem:[#allocation2] sm:$0xf]
    %v99 = vld [vmem:[#allocation2 + $0x4] sm:$0xf]
    %v100 = vld [vmem:[#allocation5] sm:$0xf]
    %v101 = vld [vmem:[#allocation5 + $0x4] sm:$0xf]
    %v102 = vld [vmem:[#allocation10] sm:$0x1]
    %v103 = vperm.slane %v102, 0
    %v106 = vunpack.c.l.b16 %v98
    %v107 = vunpack.c.l.b16 %v99
    %v108 = vpack.c.b16 %v107, %v106
    %v111 = vunpack.c.l.b16 %v100
    %v112 = vunpack.c.l.b16 %v101
    %v113 = vpack.c.b16 %v112, %v111
    %vm115 = vcmask 130048
    %v117 = vsel %vm115, %v108, 0
    %119 = vmatpush.bf16.msra.mxu0 0
    %120 = vmatpush.bf16.msra.mxu0 0
    %121 = vmatpush.bf16.msra.mxu0 0
    %122 = vmatpush.bf16.msra.mxu0 0
    %123 = vmatpush.bf16.msra.mxu0 0
    %124 = vmatpush.bf16.msra.mxu0 0
    %125 = vmatpush.bf16.msra.mxu0 0
    %126 = vmatpush.bf16.msra.mxu0 %v113
    %127 = vmatmul.bf16.gmra.mxu0 %v117
    %v128 = vpop.f32.mrf.mxu0
    %v129 = vadd.f32 %v103, %v128
    %v130 = vpop.f32.mrf.mxu0
    %v131 = vadd.f32 %v103, %v130
    %132 = vdwg.mxu0
    %v133 = vld [vmem:[#allocation10 + $0x1] sm:$0x1]
    %v134 = vld [vmem:[#allocation10 + $0x2] sm:$0x1]
    %135 = vadd.xlane.f32.xlu0 %v129
    %v136 = vpop.xlane.xlu0 %135
    %137 = vadd.xlane.f32.xlu0 %v131
    %v138 = vpop.xlane.xlu0 %137
    %v139 = vmul.f32 %v136, 0.015625
    %v140 = vmul.f32 %v138, 0.015625
    %v141 = vsub.f32 %v129, %v139
    %v142 = vsub.f32 %v131, %v140
    %v143 = vlaneseq
    %v144 = vand.u32 %v143, 127
    %vm145 = vcmp.lt.s32.totalorder %v144, 64
    %v146 = vsel %vm145, 1, 0
    %vm147 = vcmp.eq.s32.totalorder %v146, 1
    %v148 = vsel %vm147, %v141, 0.0
    %v149 = vsel %vm147, %v142, 0.0
    %v150 = vmul.f32 %v148, %v148
    %v151 = vmul.f32 %v149, %v149
    %152 = vadd.xlane.f32.xlu0 %v150
    %v153 = vpop.xlane.xlu0 %152
    %154 = vadd.xlane.f32.xlu0 %v151
    %v155 = vpop.xlane.xlu0 %154
    %v156 = vmul.f32 %v153, 0.015625
    %v157 = vmul.f32 %v155, 0.015625
    %v158 = vadd.f32 %v156, 1e-05
    %v159 = vadd.f32 %v157, 1e-05
    %v160 = vrsqrt.pop %v158
    %v161 = vmul.f32 %v160, %v158
    %v162 = vmul.f32 %v161, %v160
    %v163 = vmul.f32 0.5, %v162
    %v164 = vsub.f32 1.5, %v163
    %v165 = vmul.f32 %v160, %v164
    %vm166 = vweird.f32 %v158
    %vm167 = vweird.f32 %v160
    %vm168 = vmor %vm166, %vm167
    %v169 = vsel %vm168, %v160, %v165
    %v170 = vrsqrt.pop %v159
    %v171 = vmul.f32 %v170, %v159
    %v172 = vmul.f32 %v171, %v170
    %v173 = vmul.f32 0.5, %v172
    %v174 = vsub.f32 1.5, %v173
    %v175 = vmul.f32 %v170, %v174
    %vm176 = vweird.f32 %v159
    %vm177 = vweird.f32 %v170
    %vm178 = vmor %vm176, %vm177
    %v179 = vsel %vm178, %v170, %v175
    %v180 = vmul.f32 %v148, %v169
    %v181 = vmul.f32 %v149, %v179
    %v182 = vperm.slane %v133, 0
    %v183 = vmul.f32 %v180, %v182
    %v184 = vmul.f32 %v181, %v182
    %v185 = vperm.slane %v134, 0
    %v186 = vadd.f32 %v183, %v185
    %v187 = vadd.f32 %v184, %v185
    %v188 = vmax.f32 %v186, 0.0
    %v189 = vmax.f32 %v187, 0.0
    %v190 = vpack.c.bf16 %v189, %v188
    %v191 = vld [vmem:[#allocation7] sm:$0xf]
    %v192 = vld [vmem:[#allocation7 + $0x4] sm:$0xf]
    %v193 = vld [vmem:[#allocation7 + $0x8] sm:$0xf]
    %v194 = vld [vmem:[#allocation7 + $0xc] sm:$0xf]
    %v195 = vld [vmem:[#allocation7 + $0x10] sm:$0xf]
    %v196 = vld [vmem:[#allocation7 + $0x14] sm:$0xf]
    %v197 = vld [vmem:[#allocation7 + $0x18] sm:$0xf]
    %v198 = vld [vmem:[#allocation7 + $0x1c] sm:$0xf]
    %v199 = vld [vmem:[#allocation7 + $0x20] sm:$0xf]
    %v200 = vld [vmem:[#allocation7 + $0x24] sm:$0xf]
    %v201 = vld [vmem:[#allocation7 + $0x28] sm:$0xf]
    %v202 = vld [vmem:[#allocation7 + $0x2c] sm:$0xf]
    %v203 = vld [vmem:[#allocation7 + $0x30] sm:$0xf]
    %v204 = vld [vmem:[#allocation7 + $0x34] sm:$0xf]
    %v205 = vld [vmem:[#allocation7 + $0x38] sm:$0xf]
    %v206 = vld [vmem:[#allocation7 + $0x3c] sm:$0xf]
    %v207 = vld [vmem:[#allocation10 + $0x3] sm:$0x1]
    %v208 = vperm.slane %v207, 0
    %v225 = vunpack.c.l.b16 %v191
    %v226 = vunpack.c.l.b16 %v192
    %v227 = vunpack.c.l.b16 %v193
    %v228 = vunpack.c.l.b16 %v194
    %v229 = vunpack.c.l.b16 %v195
    %v230 = vunpack.c.l.b16 %v196
    %v231 = vunpack.c.l.b16 %v197
    %v232 = vunpack.c.l.b16 %v198
    %v233 = vunpack.c.l.b16 %v199
    %v234 = vunpack.c.l.b16 %v200
    %v235 = vunpack.c.l.b16 %v201
    %v236 = vunpack.c.l.b16 %v202
    %v237 = vunpack.c.l.b16 %v203
    %v238 = vunpack.c.l.b16 %v204
    %v239 = vunpack.c.l.b16 %v205
    %v240 = vunpack.c.l.b16 %v206
    %v241 = vpack.c.b16 %v226, %v225
    %v242 = vpack.c.b16 %v228, %v227
    %v243 = vpack.c.b16 %v230, %v229
    %v244 = vpack.c.b16 %v232, %v231
    %v245 = vpack.c.b16 %v234, %v233
    %v246 = vpack.c.b16 %v236, %v235
    %v247 = vpack.c.b16 %v238, %v237
    %v248 = vpack.c.b16 %v240, %v239
    %257 = vmatpush.bf16.msra.mxu0 %v248
    %258 = vmatpush.bf16.msra.mxu0 %v247
    %259 = vmatpush.bf16.msra.mxu0 %v246
    %260 = vmatpush.bf16.msra.mxu0 %v245
    %261 = vmatpush.bf16.msra.mxu0 %v244
    %262 = vmatpush.bf16.msra.mxu0 %v243
    %263 = vmatpush.bf16.msra.mxu0 %v242
    %264 = vmatpush.bf16.msra.mxu0 %v241
    %265 = vmatmul.bf16.gmra.mxu0 %v190
    %v266 = vpop.f32.mrf.mxu0
    %v267 = vadd.f32 %v208, %v266
    %v268 = vpop.f32.mrf.mxu0
    %v269 = vadd.f32 %v208, %v268
    %270 = vdwg.mxu0
    %v271 = vld [vmem:[#allocation10 + $0x4] sm:$0x1]
    %v272 = vld [vmem:[#allocation10 + $0x5] sm:$0x1]
    %273 = vadd.xlane.f32.xlu0 %v267
    %v274 = vpop.xlane.xlu0 %273
    %275 = vadd.xlane.f32.xlu0 %v269
    %v276 = vpop.xlane.xlu0 %275
    %v277 = vmul.f32 %v274, 0.03125
    %v278 = vmul.f32 %v276, 0.03125
    %v279 = vsub.f32 %v267, %v277
    %v280 = vsub.f32 %v269, %v278
    %vm281 = vcmp.lt.s32.totalorder %v144, 32
    %v282 = vsel %vm281, 1, 0
    %vm283 = vcmp.eq.s32.totalorder %v282, 1
    %v284 = vsel %vm283, %v279, 0.0
    %v285 = vsel %vm283, %v280, 0.0
    %v286 = vmul.f32 %v284, %v284
    %v287 = vmul.f32 %v285, %v285
    %288 = vadd.xlane.f32.xlu0 %v286
    %v289 = vpop.xlane.xlu0 %288
    %290 = vadd.xlane.f32.xlu0 %v287
    %v291 = vpop.xlane.xlu0 %290
    %v292 = vmul.f32 %v289, 0.03125
    %v293 = vmul.f32 %v291, 0.03125
    %v294 = vadd.f32 %v292, 1e-05
    %v295 = vadd.f32 %v293, 1e-05
    %v296 = vrsqrt.pop %v294
    %v297 = vmul.f32 %v296, %v294
    %v298 = vmul.f32 %v297, %v296
    %v299 = vmul.f32 0.5, %v298
    %v300 = vsub.f32 1.5, %v299
    %v301 = vmul.f32 %v296, %v300
    %vm302 = vweird.f32 %v294
    %vm303 = vweird.f32 %v296
    %vm304 = vmor %vm302, %vm303
    %v305 = vsel %vm304, %v296, %v301
    %v306 = vrsqrt.pop %v295
    %v307 = vmul.f32 %v306, %v295
    %v308 = vmul.f32 %v307, %v306
    %v309 = vmul.f32 0.5, %v308
    %v310 = vsub.f32 1.5, %v309
    %v311 = vmul.f32 %v306, %v310
    %vm312 = vweird.f32 %v295
    %vm313 = vweird.f32 %v306
    %vm314 = vmor %vm312, %vm313
    %v315 = vsel %vm314, %v306, %v311
    %v316 = vmul.f32 %v284, %v305
    %v317 = vmul.f32 %v285, %v315
    %v318 = vperm.slane %v271, 0
    %v319 = vmul.f32 %v316, %v318
    %v320 = vmul.f32 %v317, %v318
    %v321 = vperm.slane %v272, 0
    %v322 = vadd.f32 %v319, %v321
    %v323 = vadd.f32 %v320, %v321
    %v324 = vmax.f32 %v322, 0.0
    %v325 = vmax.f32 %v323, 0.0
    %v326 = vpack.c.bf16 %v325, %v324
    %v327 = vld [vmem:[#allocation8] sm:$0xf]
    %v328 = vld [vmem:[#allocation8 + $0x4] sm:$0xf]
    %v329 = vld [vmem:[#allocation8 + $0x8] sm:$0xf]
    %v330 = vld [vmem:[#allocation8 + $0xc] sm:$0xf]
    %v331 = vld [vmem:[#allocation8 + $0x10] sm:$0xf]
    %v332 = vld [vmem:[#allocation8 + $0x14] sm:$0xf]
    %v333 = vld [vmem:[#allocation8 + $0x18] sm:$0xf]
    %v334 = vld [vmem:[#allocation8 + $0x1c] sm:$0xf]
    %v335 = vld [vmem:[#allocation8 + $0x20] sm:$0xf]
    %v336 = vld [vmem:[#allocation8 + $0x24] sm:$0xf]
    %v337 = vld [vmem:[#allocation8 + $0x28] sm:$0xf]
    %v338 = vld [vmem:[#allocation8 + $0x2c] sm:$0xf]
    %v339 = vld [vmem:[#allocation8 + $0x30] sm:$0xf]
    %v340 = vld [vmem:[#allocation8 + $0x34] sm:$0xf]
    %v341 = vld [vmem:[#allocation8 + $0x38] sm:$0xf]
    %v342 = vld [vmem:[#allocation8 + $0x3c] sm:$0xf]
    %v343 = vld [vmem:[#allocation10 + $0x6] sm:$0x1]
    %v344 = vperm.slane %v343, 0
    %v361 = vunpack.c.l.b16 %v327
    %v362 = vunpack.c.l.b16 %v328
    %v363 = vunpack.c.l.b16 %v329
    %v364 = vunpack.c.l.b16 %v330
    %v365 = vunpack.c.l.b16 %v331
    %v366 = vunpack.c.l.b16 %v332
    %v367 = vunpack.c.l.b16 %v333
    %v368 = vunpack.c.l.b16 %v334
    %v369 = vunpack.c.l.b16 %v335
    %v370 = vunpack.c.l.b16 %v336
    %v371 = vunpack.c.l.b16 %v337
    %v372 = vunpack.c.l.b16 %v338
    %v373 = vunpack.c.l.b16 %v339
    %v374 = vunpack.c.l.b16 %v340
    %v375 = vunpack.c.l.b16 %v341
    %v376 = vunpack.c.l.b16 %v342
    %v377 = vpack.c.b16 %v362, %v361
    %v378 = vpack.c.b16 %v364, %v363
    %v379 = vpack.c.b16 %v366, %v365
    %v380 = vpack.c.b16 %v368, %v367
    %v381 = vpack.c.b16 %v370, %v369
    %v382 = vpack.c.b16 %v372, %v371
    %v383 = vpack.c.b16 %v374, %v373
    %v384 = vpack.c.b16 %v376, %v375
    %393 = vmatpush.bf16.msra.mxu0 %v384
    %394 = vmatpush.bf16.msra.mxu0 %v383
    %395 = vmatpush.bf16.msra.mxu0 %v382
    %396 = vmatpush.bf16.msra.mxu0 %v381
    %397 = vmatpush.bf16.msra.mxu0 %v380
    %398 = vmatpush.bf16.msra.mxu0 %v379
    %399 = vmatpush.bf16.msra.mxu0 %v378
    %400 = vmatpush.bf16.msra.mxu0 %v377
    %401 = vmatmul.bf16.gmra.mxu0 %v326
    %v402 = vpop.f32.mrf.mxu0
    %v403 = vadd.f32 %v344, %v402
    %v404 = vpop.f32.mrf.mxu0
    %v405 = vadd.f32 %v344, %v404
    %406 = vdwg.mxu0
    %v407 = vtanh.pop %v403
    %v408 = vtanh.pop %v405
    %409 = vst [vmem:[#allocation11] sm:$0xff] %v407
    %410 = vst [vmem:[#allocation11 + $0x8] sm:$0xff] %v408
    // Predicated region
    $region42: #{tpu_custom_call.1} parent=1 // pred_check
      _
    $region43: #{tpu_custom_call.1} parent=1 // pred_check_branch
      %412 = sbr.rel (0) target = $region45
    $region44: #{tpu_custom_call.1} parent=1 // pred_region
      %414 = vsyncadd [#allocation4], 0
      %s415 = sshll.u32 [#allocation11], 4
      %s416 = int_to_ptr.vmem [resolvable:$true] %s415
      %s417 = sshll.u32 %s5, 4
      %s418 = int_to_ptr.hbm [resolvable:$true] %s417
      %423 = dma.vmem_to_hbm [thread:$0]  %s416, 256, %s418, [#allocation4], 128, 128, 8
    $region45: #{tpu_custom_call.1} parent=1 // pred_fallthru
      _
    // Predicated region
    $region46: #{tpu_custom_call.1} parent=1 // pred_check
      _
    $region47: #{tpu_custom_call.1} parent=1 // pred_check_branch
      %425 = sbr.rel (0) target = $region49
    $region48: #{tpu_custom_call.1} parent=1 // pred_region
      %427 = dma.done [#allocation4], 256
    $region49: #{tpu_custom_call.1} parent=1 // pred_fallthru
      _
    %428 = vsyncpa [#allocation3], 1
    %429 = vsyncpa [#allocation6], 1
    %430 = vsyncpa [#allocation9], 1
    %431 = vsyncpa [#allocation4], 1

</llo_original>
